<compile_context>
chip_gen: v7x
topology: tpu7x:2x2x1
jax: 0.10.0
libtpu: 0.0.40
codegen_flags: <defaults>
</compile_context>

<pallas_src>
import functools

import jax
import jax.numpy as jnp
from jax.experimental import pallas as pl
from jax.experimental.pallas import tpu as pltpu

EPS = 1e-6  # torch.pairwise_distance default eps


def _contrastive_loss_kernel(margin_ref, o1_ref, o2_ref, lab_ref, out_ref,
                             acc_ref, *, tile_b, tiles_per_core, n_valid,
                             needs_mask):
    c = pl.program_id(0)  # core segment ("parallel")
    i = pl.program_id(1)  # tile within the segment ("arbitrary" reduction)

    # Zero the per-segment running accumulator at the start of each segment.
    @pl.when(i == 0)
    def _():
        acc_ref[...] = jnp.zeros_like(acc_ref)

    margin = margin_ref[0, 0]

    o1 = o1_ref[...].astype(jnp.float32)
    o2 = o2_ref[...].astype(jnp.float32)
    lab = lab_ref[...].astype(jnp.float32)                # (tile_b, 1)

    # torch.pairwise_distance: ||x1 - x2 + eps||_2 along last dim, keepdim=True
    diff = o1 - o2 + EPS                                   # (tile_b, D)
    d2 = jnp.sum(diff * diff, axis=-1, keepdims=True)      # (tile_b, 1)
    d = jnp.sqrt(d2)                                       # EUP slot, ~free

    # (1 - label) * d^2 + label * clamp(margin - d, 0)^2    (reuse d2, no d*d)
    hinge = jnp.maximum(margin - d, 0.0)
    per_pair = (1.0 - lab) * d2 + lab * (hinge * hinge)    # (tile_b, 1)

    if needs_mask:
        # Rows past the true batch (ragged tail / fully-OOB filler tiles) hold
        # garbage: select them to 0 (where, not multiply) before accumulating.
        blk = c * tiles_per_core + i
        row = (jax.lax.broadcasted_iota(jnp.int32, per_pair.shape, 0)
               + blk * tile_b)
        per_pair = jnp.where(row < n_valid, per_pair, 0.0)

    # Vector-shaped accumulator: cross-sublane reduce deferred to finalize.
    acc_ref[...] += per_pair

    # Single, lane-dense writeback of this segment's partial sum.
    @pl.when(i == pl.num_programs(1) - 1)
    def _():
        partial = jnp.sum(acc_ref[...])
        out_ref[...] = jnp.full(out_ref.shape, partial, dtype=out_ref.dtype)


def _choose_tile_b(B, D, itemsize):
    # Sublane packing alignment for the input dtype.
    if itemsize >= 4:
        row_align = 8
    elif itemsize == 2:
        row_align = 16
    else:
        row_align = 32
    if B <= row_align:
        return int(B)  # single full-dim block: always a legal layout
    # ~2 MiB of f32 per input tile; 2 inputs x 2 pipeline buffers ~= 8 MiB VMEM.
    max_rows = max(row_align, ((2 << 20) // (4 * D)) // row_align * row_align)
    tile_b = min((B // row_align) * row_align, max_rows)
    return int(tile_b)


def contrastive_loss(output1, output2, label, margin=2.0):
    B, D = output1.shape
    if label.ndim == 1:
        label = label.reshape(B, 1)

    tile_b = _choose_tile_b(B, D, jnp.dtype(output1.dtype).itemsize)
    num_tiles = int(pl.cdiv(B, tile_b))

    # Split the batch-tile reduction into (up to) two "parallel" segments so
    # v7x's two TensorCores can both stream; a no-op on single-TC v5e/v6e.
    num_cores = 2 if num_tiles >= 2 else 1
    tiles_per_core = int(pl.cdiv(num_tiles, num_cores))
    last_block = num_tiles - 1
    needs_mask = (num_cores * tiles_per_core * tile_b) != B

    margin_arr = jnp.full((1, 1), margin, dtype=jnp.float32)

    def batch_block(c, i):
        # Clamp so filler tiles (when the segment split over-covers the batch)
        # never DMA a block fully out of bounds; their rows are masked anyway.
        return jnp.minimum(c * tiles_per_core + i, last_block)

    kernel = functools.partial(
        _contrastive_loss_kernel,
        tile_b=tile_b, tiles_per_core=tiles_per_core, n_valid=B,
        needs_mask=needs_mask)

    partials = pl.pallas_call(
        kernel,
        out_shape=jax.ShapeDtypeStruct((num_cores, 8, 128), jnp.float32),
        grid=(num_cores, tiles_per_core),
        in_specs=[
            pl.BlockSpec(memory_space=pltpu.SMEM),                      # margin
            pl.BlockSpec((tile_b, D), lambda c, i: (batch_block(c, i), 0)),
            pl.BlockSpec((tile_b, D), lambda c, i: (batch_block(c, i), 0)),
            pl.BlockSpec((tile_b, 1), lambda c, i: (batch_block(c, i), 0)),
        ],
        out_specs=pl.BlockSpec((1, 8, 128), lambda c, i: (c, 0, 0)),
        scratch_shapes=[pltpu.VMEM((tile_b, 1), jnp.float32)],
        compiler_params=pltpu.CompilerParams(
            dimension_semantics=("parallel", "arbitrary"),
            vmem_limit_bytes=32 * 1024 * 1024),
    )(margin_arr, output1, output2, label)

    # Tiny host-side finalize: sum the per-segment partials, mean over B.
    return jnp.sum(partials[:, 0, 0]) * (1.0 / float(B))


def _reference(output1, output2, label, margin=2.0):
    o1 = output1.astype(jnp.float32)
    o2 = output2.astype(jnp.float32)
    lab = label.astype(jnp.float32)
    if lab.ndim == 1:
        lab = lab.reshape(-1, 1)
    diff = o1 - o2 + EPS
    d = jnp.sqrt(jnp.sum(diff * diff, axis=-1, keepdims=True))
    hinge = jnp.clip(margin - d, 0.0, None)
    return jnp.mean((1.0 - lab) * d ** 2 + lab * hinge ** 2)


if __name__ == "__main__":
    key = jax.random.PRNGKey(0)
    k1, k2, k3, k4, k5, k6 = jax.random.split(key, 6)

    # Case 1: small aligned batch of embeddings, as the module's forward implies.
    B, D = 8, 32
    o1 = jax.random.normal(k1, (B, D), dtype=jnp.float32)
    o2 = jax.random.normal(k2, (B, D), dtype=jnp.float32)
    lab = jax.random.bernoulli(k3, 0.5, (B, 1)).astype(jnp.float32)
    loss = contrastive_loss(o1, o2, lab, margin=2.0)
    jax.block_until_ready(loss)
    ref = _reference(o1, o2, lab, margin=2.0)
    assert jnp.allclose(loss, ref, rtol=1e-5, atol=1e-5), (loss, ref)

    # Case 2: ragged batch — no wrapper-side padding, in-kernel mask only.
    B2, D2 = 13, 32
    o1b = jax.random.normal(k4, (B2, D2), dtype=jnp.float32)
    o2b = jax.random.normal(k5, (B2, D2), dtype=jnp.float32)
    labb = jax.random.bernoulli(k6, 0.5, (B2, 1)).astype(jnp.float32)
    loss2 = contrastive_loss(o1b, o2b, labb, margin=2.0)
    jax.block_until_ready(loss2)
    ref2 = _reference(o1b, o2b, labb, margin=2.0)
    assert jnp.allclose(loss2, ref2, rtol=1e-5, atol=1e-5), (loss2, ref2)

    print("KERNEL_OK")
</pallas_src>

<mosaic_0001>
module attributes {stable_mosaic.version = 11 : i64} {
  func.func @_contrastive_loss_kernel(%arg0: i32, %arg1: i32, %arg2: memref<1x1xf32, #tpu.memory_space<smem>>, %arg3: memref<8x32xf32, #tpu.memory_space<vmem>>, %arg4: memref<8x32xf32, #tpu.memory_space<vmem>>, %arg5: memref<8x1xf32, #tpu.memory_space<vmem>>, %arg6: memref<1x8x128xf32, #tpu.memory_space<vmem>>, %arg7: memref<8x1xf32, #tpu.memory_space<vmem>>) attributes {dimension_semantics = [#tpu.dimension_semantics<parallel>, #tpu.dimension_semantics<arbitrary>], iteration_bounds = array<i64: 1, 1>, scalar_prefetch = 0 : i64, scratch_operands = 1 : i64, tpu.core_type = #tpu.core_type<tc>, window_params = [{transform_indices = @transform_0, window_bounds = array<i64: 1, 1>}, {transform_indices = @transform_1, window_bounds = array<i64: 8, 32>}, {transform_indices = @transform_2, window_bounds = array<i64: 8, 32>}, {transform_indices = @transform_3, window_bounds = array<i64: 8, 1>}, {transform_indices = @transform_4, window_bounds = array<i64: 1, 8, 128>}]} {
    %c0_i32 = arith.constant 0 : i32
    %0 = arith.cmpi eq, %arg1, %c0_i32 : i32
    %1 = arith.extui %0 : i1 to i32
    %c0_i32_0 = arith.constant 0 : i32
    %2 = arith.cmpi ne, %1, %c0_i32_0 : i32
    scf.if %2 {
      %cst_17 = arith.constant 0.000000e+00 : f32
      %30 = vector.broadcast %cst_17 : f32 to vector<8x1xf32>
      %c0_18 = arith.constant 0 : index
      %c0_19 = arith.constant 0 : index
      %31 = vector.load %arg7[%c0_18, %c0_19] : memref<8x1xf32, #tpu.memory_space<vmem>>, vector<8x1xf32>
      tpu.vector_store %arg7[%c0_18, %c0_19], %30 {strides = array<i32>} : memref<8x1xf32, #tpu.memory_space<vmem>>, vector<8x1xf32>,
    } else {
    }
    %c0 = arith.constant 0 : index
    %c0_1 = arith.constant 0 : index
    %3 = memref.load %arg2[%c0, %c0_1] : memref<1x1xf32, #tpu.memory_space<smem>>
    %c0_2 = arith.constant 0 : index
    %c0_3 = arith.constant 0 : index
    %4 = vector.load %arg3[%c0_2, %c0_3] : memref<8x32xf32, #tpu.memory_space<vmem>>, vector<8x32xf32>
    %c0_4 = arith.constant 0 : index
    %c0_5 = arith.constant 0 : index
    %5 = vector.load %arg4[%c0_4, %c0_5] : memref<8x32xf32, #tpu.memory_space<vmem>>, vector<8x32xf32>
    %c0_6 = arith.constant 0 : index
    %c0_7 = arith.constant 0 : index
    %6 = vector.load %arg5[%c0_6, %c0_7] : memref<8x1xf32, #tpu.memory_space<vmem>>, vector<8x1xf32>
    %7 = arith.subf %4, %5 : vector<8x32xf32>
    %cst = arith.constant 9.99999997E-7 : f32
    %8 = vector.broadcast %cst : f32 to vector<8x32xf32>
    %9 = arith.addf %7, %8 : vector<8x32xf32>
    %10 = arith.mulf %9, %9 : vector<8x32xf32>
    %cst_8 = arith.constant dense<0.000000e+00> : vector<8xf32>
    %11 = vector.multi_reduction <add>, %10, %cst_8 [1] : vector<8x32xf32> to vector<8xf32>
    %12 = vector.shape_cast %11 : vector<8xf32> to vector<8x1xf32>
    %13 = math.sqrt %12 : vector<8x1xf32>
    %14 = vector.broadcast %3 : f32 to vector<8x1xf32>
    %15 = arith.subf %14, %13 : vector<8x1xf32>
    %cst_9 = arith.constant 0.000000e+00 : f32
    %16 = vector.broadcast %cst_9 : f32 to vector<8x1xf32>
    %17 = arith.maximumf %15, %16 : vector<8x1xf32>
    %cst_10 = arith.constant 1.000000e+00 : f32
    %18 = vector.broadcast %cst_10 : f32 to vector<8x1xf32>
    %19 = arith.subf %18, %6 : vector<8x1xf32>
    %20 = arith.mulf %19, %12 : vector<8x1xf32>
    %21 = arith.mulf %17, %17 : vector<8x1xf32>
    %22 = arith.mulf %6, %21 : vector<8x1xf32>
    %23 = arith.addf %20, %22 : vector<8x1xf32>
    %c0_11 = arith.constant 0 : index
    %c0_12 = arith.constant 0 : index
    %24 = vector.load %arg7[%c0_11, %c0_12] : memref<8x1xf32, #tpu.memory_space<vmem>>, vector<8x1xf32>
    %25 = arith.addf %24, %23 : vector<8x1xf32>
    %c0_13 = arith.constant 0 : index
    %c0_14 = arith.constant 0 : index
    %26 = vector.load %arg7[%c0_13, %c0_14] : memref<8x1xf32, #tpu.memory_space<vmem>>, vector<8x1xf32>
    tpu.vector_store %arg7[%c0_13, %c0_14], %25 {strides = array<i32>} : memref<8x1xf32, #tpu.memory_space<vmem>>, vector<8x1xf32>,
    %c0_i32_15 = arith.constant 0 : i32
    %27 = arith.cmpi eq, %arg1, %c0_i32_15 : i32
    %28 = arith.extui %27 : i1 to i32
    %c0_i32_16 = arith.constant 0 : i32
    %29 = arith.cmpi ne, %28, %c0_i32_16 : i32
    scf.if %29 {
      %c0_17 = arith.constant 0 : index
      %c0_18 = arith.constant 0 : index
      %30 = vector.load %arg7[%c0_17, %c0_18] : memref<8x1xf32, #tpu.memory_space<vmem>>, vector<8x1xf32>
      %31 = vector.shape_cast %30 : vector<8x1xf32> to vector<1x8x1xf32>
      %cst_19 = arith.constant dense<0.000000e+00> : vector<1xf32>
      %32 = vector.multi_reduction <add>, %31, %cst_19 [1, 2] : vector<1x8x1xf32> to vector<1xf32>
      %33 = vector.shape_cast %32 : vector<1xf32> to vector<1x1x1xf32>
      %34 = vector.extract %33[0, 0, 0] : f32 from vector<1x1x1xf32>
      %35 = vector.broadcast %34 : f32 to vector<1x8x128xf32>
      %c0_20 = arith.constant 0 : index
      %c0_21 = arith.constant 0 : index
      %c0_22 = arith.constant 0 : index
      %36 = vector.load %arg6[%c0_20, %c0_21, %c0_22] : memref<1x8x128xf32, #tpu.memory_space<vmem>>, vector<1x8x128xf32>
      tpu.vector_store %arg6[%c0_20, %c0_21, %c0_22], %35 {strides = array<i32>} : memref<1x8x128xf32, #tpu.memory_space<vmem>>, vector<1x8x128xf32>,
    } else {
    }
    return
  }
  func.func @transform_0(%arg0: i32, %arg1: i32) -> (i32, i32) {
    %c0_i32 = arith.constant 0 : i32
    %c0_i32_0 = arith.constant 0 : i32
    %c0_i32_1 = arith.constant 0 : i32
    return %c0_i32, %c0_i32_0 : i32, i32
  }
  func.func @transform_1(%arg0: i32, %arg1: i32) -> (i32, i32) {
    %c1_i32 = arith.constant 1 : i32
    %0 = arith.muli %arg0, %c1_i32 : i32
    %1 = arith.addi %0, %arg1 : i32
    %c0_i32 = arith.constant 0 : i32
    %2 = arith.minsi %1, %c0_i32 : i32
    %c0_i32_0 = arith.constant 0 : i32
    %c0_i32_1 = arith.constant 0 : i32
    return %2, %c0_i32_0 : i32, i32
  }
  func.func @transform_2(%arg0: i32, %arg1: i32) -> (i32, i32) {
    %c1_i32 = arith.constant 1 : i32
    %0 = arith.muli %arg0, %c1_i32 : i32
    %1 = arith.addi %0, %arg1 : i32
    %c0_i32 = arith.constant 0 : i32
    %2 = arith.minsi %1, %c0_i32 : i32
    %c0_i32_0 = arith.constant 0 : i32
    %c0_i32_1 = arith.constant 0 : i32
    return %2, %c0_i32_0 : i32, i32
  }
  func.func @transform_3(%arg0: i32, %arg1: i32) -> (i32, i32) {
    %c1_i32 = arith.constant 1 : i32
    %0 = arith.muli %arg0, %c1_i32 : i32
    %1 = arith.addi %0, %arg1 : i32
    %c0_i32 = arith.constant 0 : i32
    %2 = arith.minsi %1, %c0_i32 : i32
    %c0_i32_0 = arith.constant 0 : i32
    %c0_i32_1 = arith.constant 0 : i32
    return %2, %c0_i32_0 : i32, i32
  }
  func.func @transform_4(%arg0: i32, %arg1: i32) -> (i32, i32, i32) {
    %c0_i32 = arith.constant 0 : i32
    %c0_i32_0 = arith.constant 0 : i32
    %c0_i32_1 = arith.constant 0 : i32
    return %arg0, %c0_i32, %c0_i32_0 : i32, i32, i32
  }
}

</mosaic_0001>

<llo_original>
// kernel: tpu_custom_call.1
$region0: #{tpu_custom_call.1}
  #allocation0 [shape = 'u32[]', space=smem, size = 0x4, offset = 0x4, fixed_abs, tag = 'smem constant byte address 0x4 - core index']
  #allocation1 [shape = 'u32[144,128]{1,0:T(1,128)}', space=vmem, size = 0x12000, scoped, tag = 'internal scratch']
  #allocation2 [shape = 'f32[8,1]{1,0:T(8,128)}', space=vmem, size = 0x1000, scoped, tag = 'scratch operand']
  #allocation3 [shape = 'f32[1,1]{1,0:T(1,128)S(6)}', space=smem, size = 0x200, scoped, tag = 'scoped memory for tpu_custom_call.1']
  %s0 = inlined_call_operand.<no memory space> [shape: f32[1,1], index: 0, kind: input, shape index: {}]
  %s1 = inlined_call_operand.vmem [shape: f32[8,32], index: 1, kind: input, shape index: {}]
  %s2 = inlined_call_operand.vmem [shape: f32[8,32], index: 2, kind: input, shape index: {}]
  %s3 = inlined_call_operand.vmem [shape: f32[8,1], index: 3, kind: input, shape index: {}]
  %s4 = inlined_call_operand.hbm [shape: f32[1,8,128], index: 4, kind: output, shape index: {}]
  %s5 = sld [smem:[#allocation0]]
  $region34: #{tpu_custom_call.1} parent=0
    _
  %s7 = ssub.s32 1, %s5
  %s8 = scalar_select 0, %s7, %s5
  %9 = sst [smem:[#allocation3]] %s0
  $region1: #{tpu_custom_call.1} parent=0
    #allocation4 [shape = 'u8[4096]{0}', space=vmem, size = 0x1000, scoped, tag = 'output window, operand 0, single buffered']
    #allocation5 [shape = 's32[1]{0}', space=sflag, size = 0x4, scoped, tag = 'scoped memory for tpu_custom_call.1']
    %10 = vsyncpa [#allocation5], 0
    // Predicated region
    $region2: #{tpu_custom_call.1} parent=1 // pred_check
      _
    $region3: #{tpu_custom_call.1} parent=1 // pred_check_branch
      %12 = sbr.rel (0) target = $region5
    $region4: #{tpu_custom_call.1} parent=1 // pred_region
      _
    $region5: #{tpu_custom_call.1} parent=1 // pred_fallthru
      _
    // Predicated region
    $region6: #{tpu_custom_call.1} parent=1 // pred_check
      _
    $region7: #{tpu_custom_call.1} parent=1 // pred_check_branch
      %14 = sbr.rel (0) target = $region9
    $region8: #{tpu_custom_call.1} parent=1 // pred_region
      %s15 = sadd.s32 0, 0
      %p16 = scmp.lt.s32.totalorder %s15, 0
      %s17 = scalar_select %p16, %s15, 0
      %p18 = scmp.lt.s32.totalorder %s17, 0
      %s19 = scalar_select %p18, %s17, 0
      %s20 = smul.addr %s19, 8
      %s21 = scalar_lea.vmem %s1, %s20
      %s22 = sadd.s32 0, 0
      %p23 = scmp.lt.s32.totalorder %s22, 0
      %s24 = scalar_select %p23, %s22, 0
    $region9: #{tpu_custom_call.1} parent=1 // pred_fallthru
      _
    // Predicated region
    $region10: #{tpu_custom_call.1} parent=1 // pred_check
      _
    $region11: #{tpu_custom_call.1} parent=1 // pred_check_branch
      %26 = sbr.rel (0) target = $region13
    $region12: #{tpu_custom_call.1} parent=1 // pred_region
      %s27 = sadd.s32 0, 0
      %p28 = scmp.lt.s32.totalorder %s27, 0
      %s29 = scalar_select %p28, %s27, 0
      %p30 = scmp.lt.s32.totalorder %s29, 0
      %s31 = scalar_select %p30, %s29, 0
      %s32 = smul.addr %s31, 8
      %s33 = scalar_lea.vmem %s2, %s32
      %s34 = sadd.s32 0, 0
      %p35 = scmp.lt.s32.totalorder %s34, 0
      %s36 = scalar_select %p35, %s34, 0
    $region13: #{tpu_custom_call.1} parent=1 // pred_fallthru
      _
    // Predicated region
    $region14: #{tpu_custom_call.1} parent=1 // pred_check
      _
    $region15: #{tpu_custom_call.1} parent=1 // pred_check_branch
      %38 = sbr.rel (0) target = $region17
    $region16: #{tpu_custom_call.1} parent=1 // pred_region
      %s39 = sadd.s32 0, 0
      %p40 = scmp.lt.s32.totalorder %s39, 0
      %s41 = scalar_select %p40, %s39, 0
      %p42 = scmp.lt.s32.totalorder %s41, 0
      %s43 = scalar_select %p42, %s41, 0
      %s44 = smul.addr %s43, 8
      %s45 = scalar_lea.vmem %s3, %s44
      %s46 = sadd.s32 0, 0
      %p47 = scmp.lt.s32.totalorder %s46, 0
      %s48 = scalar_select %p47, %s46, 0
    $region17: #{tpu_custom_call.1} parent=1 // pred_fallthru
      _
    %s49 = sadd.s32 0, 0
    %p50 = scmp.lt.s32.totalorder %s49, 0
    %s51 = scalar_select %p50, %s49, 0
    %p52 = scmp.lt.s32.totalorder %s51, 0
    %s53 = scalar_select %p52, %s51, 0
    %s54 = smul.addr %s53, 8
    %s55 = scalar_lea.vmem %s1, %s54
    %s56 = sadd.s32 0, 0
    %p57 = scmp.lt.s32.totalorder %s56, 0
    %s58 = scalar_select %p57, %s56, 0
    %p59 = scmp.lt.s32.totalorder %s58, 0
    %s60 = scalar_select %p59, %s58, 0
    %s61 = smul.addr %s60, 8
    %s62 = scalar_lea.vmem %s2, %s61
    %s63 = sadd.s32 0, 0
    %p64 = scmp.lt.s32.totalorder %s63, 0
    %s65 = scalar_select %p64, %s63, 0
    %p66 = scmp.lt.s32.totalorder %s65, 0
    %s67 = scalar_select %p66, %s65, 0
    %s68 = smul.addr %s67, 8
    %s69 = scalar_lea.vmem %s3, %s68
    %s70 = sadd.s32 0, 0
    %p71 = scmp.lt.s32.totalorder %s70, 0
    %s72 = scalar_select %p71, %s70, 0
    %p73 = scmp.lt.s32.totalorder %s72, 0
    %s74 = scalar_select %p73, %s72, 0
    %s75 = smul.addr %s74, 8
    %s76 = scalar_lea.vmem %s1, %s75
    %s77 = sadd.s32 0, 0
    %p78 = scmp.lt.s32.totalorder %s77, 0
    %s79 = scalar_select %p78, %s77, 0
    %s80 = sadd.s32 0, 0
    %p81 = scmp.lt.s32.totalorder %s80, 0
    %s82 = scalar_select %p81, %s80, 0
    %p83 = scmp.lt.s32.totalorder %s82, 0
    %s84 = scalar_select %p83, %s82, 0
    %s85 = smul.addr %s84, 8
    %s86 = scalar_lea.vmem %s2, %s85
    %s87 = sadd.s32 0, 0
    %p88 = scmp.lt.s32.totalorder %s87, 0
    %s89 = scalar_select %p88, %s87, 0
    %s90 = sadd.s32 0, 0
    %p91 = scmp.lt.s32.totalorder %s90, 0
    %s92 = scalar_select %p91, %s90, 0
    %p93 = scmp.lt.s32.totalorder %s92, 0
    %s94 = scalar_select %p93, %s92, 0
    %s95 = smul.addr %s94, 8
    %s96 = scalar_lea.vmem %s3, %s95
    %s97 = sadd.s32 0, 0
    %p98 = scmp.lt.s32.totalorder %s97, 0
    %s99 = scalar_select %p98, %s97, 0
    %p100 = scmp.eq.s32.totalorder 0, 0
    // Predicated region
    $region18: #{tpu_custom_call.1} parent=1 // pred_check
      %p101 = pneg %p100
    $region19: #{tpu_custom_call.1} parent=1 // pred_check_branch
      %103 = sbr.rel (%p101) target = $region21
    $region20: #{tpu_custom_call.1} parent=1 // pred_region
      %vm104 = vcmask 7168
      %105 = vst.msk [vmem:[#allocation2] sm:$0xff] %vm104, 0.0
    $region21: #{tpu_custom_call.1} parent=1 // pred_fallthru
      _
    %s106 = sld [smem:[#allocation3]]
    %v107 = vld [vmem:[%s76] sm:$0xff]
    %v108 = vld [vmem:[%s86] sm:$0xff]
    %v109 = vld [vmem:[%s96] sm:$0xff]
    %v110 = vsub.f32 %v107, %v108
    %v111 = vadd.f32 %v110, 1e-06
    %v112 = vmul.f32 %v111, %v111
    %vm113 = vcmask 261120
    %v114 = vsel %vm113, %v112, 0.0
    %115 = vadd.xlane.f32.xlu0 %v114
    %v116 = vpop.xlane.xlu0 %115
    %v117 = vrsqrt.pop %v116
    %v118 = vmul.f32 %v116, %v117
    %vm119 = vcmp.eq.f32.partialorder %v116, inf
    %v120 = vsel %vm119, %v116, %v118
    %vm121 = vcmp.eq.f32.partialorder %v116, 0.0
    %v122 = vand.u32 %v116, 2147483648
    %v123 = vsel %vm121, %v122, %v120
    %v124 = vstv %s106
    %v125 = vsub.f32 %v124, %v123
    %v126 = vmax.f32 %v125, 0.0
    %v127 = vsub.f32 1.0, %v109
    %v128 = vmul.f32 %v127, %v116
    %v129 = vmul.f32 %v126, %v126
    %v130 = vmul.f32 %v109, %v129
    %v131 = vadd.f32 %v128, %v130
    %v132 = vld [vmem:[#allocation2] sm:$0xff]
    %v133 = vadd.f32 %v132, %v131
    %vm134 = vcmask 7168
    %135 = vst.msk [vmem:[#allocation2] sm:$0xff] %vm134, %v133
    // Predicated region
    $region22: #{tpu_custom_call.1} parent=1 // pred_check
      %p136 = pneg %p100
    $region23: #{tpu_custom_call.1} parent=1 // pred_check_branch
      %138 = sbr.rel (%p136) target = $region25
    $region24: #{tpu_custom_call.1} parent=1 // pred_region
      %v139 = vld [vmem:[#allocation2] sm:$0xff]
      %v140 = vsel %vm134, %v139, 0.0
      %141 = vadd.xlane.f32.xlu0 %v140
      %v142 = vpop.xlane.xlu0 %141
      %v143 = vrot.slane %v142, 4
      %v144 = vadd.f32 %v142, %v143
      %v145 = vrot.slane %v144, 2
      %v146 = vadd.f32 %v144, %v145
      %v147 = vrot.slane %v146, 1
      %v148 = vadd.f32 %v146, %v147
      %s149 = vtos %v148
      %v150 = vstv %s149
      %151 = vst [vmem:[#allocation4] sm:$0xff] %v150
    $region25: #{tpu_custom_call.1} parent=1 // pred_fallthru
      _
    // Predicated region
    $region26: #{tpu_custom_call.1} parent=1 // pred_check
      _
    $region27: #{tpu_custom_call.1} parent=1 // pred_check_branch
      %153 = sbr.rel (0) target = $region29
    $region28: #{tpu_custom_call.1} parent=1 // pred_region
      %s155 = ssub.s32 128, 128
      %156 = vsyncadd [#allocation5], %s155
      %s158 = sshll.u32 [#allocation4], 4
      %s159 = int_to_ptr.vmem [resolvable:$true] %s158
      %161 = dma.vmem_to_hbm [thread:$0]  %s159, 128, %s4, [#allocation5]
    $region29: #{tpu_custom_call.1} parent=1 // pred_fallthru
      _
    // Predicated region
    $region30: #{tpu_custom_call.1} parent=1 // pred_check
      _
    $region31: #{tpu_custom_call.1} parent=1 // pred_check_branch
      %163 = sbr.rel (0) target = $region33
    $region32: #{tpu_custom_call.1} parent=1 // pred_region
      %164 = dma.done [#allocation5], 128
    $region33: #{tpu_custom_call.1} parent=1 // pred_fallthru
      _
    %165 = vsyncpa [#allocation5], 1

</llo_original>
